<compile_context>
chip_gen: v6e
topology: v6e:2x2x1
jax: 0.10.0
libtpu: 0.0.40
codegen_flags: <defaults>
</compile_context>

<pallas_src>
import functools

import jax
import jax.numpy as jnp
from jax.experimental import pallas as pl
from jax.experimental.pallas import tpu as pltpu


# ----------------------------------------------------------------------------
# Fused ConvLSTM-cell kernel
# ----------------------------------------------------------------------------
def _convlstm_cell_kernel(wx_ref, wh_ref, b_ref, px_ref, ph_ref, c_ref,
                          wci_ref, wcf_ref, wco_ref, ch_ref, cc_ref):
    hc = c_ref.shape[0]                          # hidden channels
    # Two MXU matmuls give all four gates for both the x and h convolutions.
    gates = (jnp.dot(wx_ref[...], px_ref[...], preferred_element_type=jnp.float32)
             + jnp.dot(wh_ref[...], ph_ref[...], preferred_element_type=jnp.float32)
             + b_ref[...])                       # [4*Ch, TM]  (bias lane-broadcast)
    c_prev = c_ref[...]
    ci = jax.nn.sigmoid(gates[0 * hc:1 * hc] + c_prev * wci_ref[...])
    cf = jax.nn.sigmoid(gates[1 * hc:2 * hc] + c_prev * wcf_ref[...])
    cc = cf * c_prev + ci * jnp.tanh(gates[2 * hc:3 * hc])
    co = jax.nn.sigmoid(gates[3 * hc:4 * hc] + cc * wco_ref[...])
    ch_ref[...] = co * jnp.tanh(cc)
    cc_ref[...] = cc


# ----------------------------------------------------------------------------
# Plain-JAX glue: im2col for a SAME, stride-1 conv (cross-correlation, as in
# PyTorch Conv2d), producing a lane-dense [C*k*k, B*H*W] patch matrix.
# ----------------------------------------------------------------------------
def _im2col(t, k):
    B, C, H, W = t.shape
    p = (k - 1) // 2
    tp = jnp.pad(t, ((0, 0), (0, 0), (p, p), (p, p)))
    cols = [tp[:, :, kh:kh + H, kw:kw + W] for kh in range(k) for kw in range(k)]
    pat = jnp.stack(cols, axis=2)                              # [B, C, k*k, H, W]
    return pat.transpose(1, 2, 0, 3, 4).reshape(C * k * k, B * H * W)


def _pick_col_tile(m):
    # Prefer >=2 lane-dense column tiles so the grid both pipelines DMAs and
    # can be split across TensorCores (v7x megacore); else one full block.
    for t in (512, 256, 128):
        if m % t == 0 and m // t >= 2:
            return t
    return m


# ----------------------------------------------------------------------------
# Forward wrapper
# ----------------------------------------------------------------------------
def convlstm_cell_forward(prep, x, h, c, *, kernel_size):
    B, Cin, H, W = x.shape
    Ch = prep["wci"].shape[0]
    k = kernel_size
    M = B * H * W

    px = _im2col(x.astype(jnp.float32), k)                      # [Cin*k*k, M]
    ph = _im2col(h.astype(jnp.float32), k)                      # [Ch*k*k,  M]
    c_cm = c.astype(jnp.float32).transpose(1, 0, 2, 3).reshape(Ch, M)
    # Peephole weights broadcast over batch (columns are batch-major).
    wci = jnp.tile(prep["wci"], (1, B))
    wcf = jnp.tile(prep["wcf"], (1, B))
    wco = jnp.tile(prep["wco"], (1, B))

    KX = Cin * k * k
    KH = Ch * k * k
    TM = _pick_col_tile(M)
    grid = (M // TM,)

    full = lambda j: (0, 0)
    col = lambda j: (0, j)

    ch_cm, cc_cm = pl.pallas_call(
        _convlstm_cell_kernel,
        out_shape=(jax.ShapeDtypeStruct((Ch, M), jnp.float32),
                   jax.ShapeDtypeStruct((Ch, M), jnp.float32)),
        grid=grid,
        in_specs=[
            pl.BlockSpec((4 * Ch, KX), full),   # stacked x-conv weights
            pl.BlockSpec((4 * Ch, KH), full),   # stacked h-conv weights
            pl.BlockSpec((4 * Ch, 1), full),    # stacked x-conv biases
            pl.BlockSpec((KX, TM), col),        # x patches
            pl.BlockSpec((KH, TM), col),        # h patches
            pl.BlockSpec((Ch, TM), col),        # c (channel-major)
            pl.BlockSpec((Ch, TM), col),        # Wci
            pl.BlockSpec((Ch, TM), col),        # Wcf
            pl.BlockSpec((Ch, TM), col),        # Wco
        ],
        out_specs=(pl.BlockSpec((Ch, TM), col),
                   pl.BlockSpec((Ch, TM), col)),
        compiler_params=pltpu.CompilerParams(
            dimension_semantics=("parallel",)),
    )(prep["wx"], prep["wh"], prep["bias"], px, ph, c_cm, wci, wcf, wco)

    ch_out = ch_cm.reshape(Ch, B, H, W).transpose(1, 0, 2, 3)
    cc_out = cc_cm.reshape(Ch, B, H, W).transpose(1, 0, 2, 3)
    return ch_out, cc_out


# ----------------------------------------------------------------------------
# Parameters (deterministic synthetic init) + one-time weight folding
# ----------------------------------------------------------------------------
def init_params(key, *, Cin, Ch, k, H, W):
    keys = iter(jax.random.split(key, 32))

    def nrm(shape, std):
        return std * jax.random.normal(next(keys), shape, dtype=jnp.float32)

    sx = (1.0 / (Cin * k * k)) ** 0.5
    sh = (1.0 / (Ch * k * k)) ** 0.5
    p = {}
    for g in ("i", "f", "c", "o"):
        p[f"Wx{g}"] = nrm((Ch, Cin, k, k), sx)   # Conv2d(Cin->Ch), bias=True
        p[f"bx{g}"] = nrm((Ch,), sx)
        p[f"Wh{g}"] = nrm((Ch, Ch, k, k), sh)    # Conv2d(Ch->Ch), bias=False
    # Peephole params Wci/Wcf/Wco: ConvLSTMCell.init_hidden creates them as
    # zeros(1, Ch, H, W); they are learnable, so use small values to exercise
    # the compute path (semantics identical).
    for g in ("ci", "cf", "co"):
        p[f"W{g}"] = nrm((1, Ch, H, W), 0.1)
    return p


def prepare_params(p, *, Cin, Ch, k, H, W):
    """Pre-stack / pre-reshape weights into matmul-ready layouts (done once)."""
    wx = jnp.concatenate([p["Wxi"], p["Wxf"], p["Wxc"], p["Wxo"]], axis=0)
    wh = jnp.concatenate([p["Whi"], p["Whf"], p["Whc"], p["Who"]], axis=0)
    bias = jnp.concatenate([p["bxi"], p["bxf"], p["bxc"], p["bxo"]], axis=0)
    return {
        "wx": wx.reshape(4 * Ch, Cin * k * k).astype(jnp.float32),
        "wh": wh.reshape(4 * Ch, Ch * k * k).astype(jnp.float32),
        "bias": bias.reshape(4 * Ch, 1).astype(jnp.float32),
        "wci": p["Wci"].reshape(Ch, H * W).astype(jnp.float32),
        "wcf": p["Wcf"].reshape(Ch, H * W).astype(jnp.float32),
        "wco": p["Wco"].reshape(Ch, H * W).astype(jnp.float32),
    }


# ----------------------------------------------------------------------------
# Pure-JAX reference of the PyTorch module (independent conv path)
# ----------------------------------------------------------------------------
def convlstm_cell_reference(p, x, h, c):
    def conv(t, w, b=None):
        out = jax.lax.conv_general_dilated(
            t, w, window_strides=(1, 1), padding="SAME",
            dimension_numbers=("NCHW", "OIHW", "NCHW"),
            precision=jax.lax.Precision.HIGHEST)
        if b is not None:
            out = out + b.reshape(1, -1, 1, 1)
        return out

    ci = jax.nn.sigmoid(conv(x, p["Wxi"], p["bxi"]) + conv(h, p["Whi"]) + c * p["Wci"])
    cf = jax.nn.sigmoid(conv(x, p["Wxf"], p["bxf"]) + conv(h, p["Whf"]) + c * p["Wcf"])
    cc = cf * c + ci * jnp.tanh(conv(x, p["Wxc"], p["bxc"]) + conv(h, p["Whc"]))
    co = jax.nn.sigmoid(conv(x, p["Wxo"], p["bxo"]) + conv(h, p["Who"]) + cc * p["Wco"])
    ch = co * jnp.tanh(cc)
    return ch, cc


if __name__ == "__main__":
    # batch=2, input_channels=4, hidden_channels=8, spatial 16x16, kernel=3
    B, Cin, Ch, Hs, Ws, K = 2, 4, 8, 16, 16, 3

    key = jax.random.PRNGKey(0)
    pkey, xkey, hkey, ckey = jax.random.split(key, 4)
    raw = init_params(pkey, Cin=Cin, Ch=Ch, k=K, H=Hs, W=Ws)
    prep = prepare_params(raw, Cin=Cin, Ch=Ch, k=K, H=Hs, W=Ws)

    x = jax.random.normal(xkey, (B, Cin, Hs, Ws), dtype=jnp.float32)
    h = jax.random.normal(hkey, (B, Ch, Hs, Ws), dtype=jnp.float32)
    c = jax.random.normal(ckey, (B, Ch, Hs, Ws), dtype=jnp.float32)

    fwd = jax.jit(functools.partial(convlstm_cell_forward, kernel_size=K))
    ch_out, cc_out = fwd(prep, x, h, c)
    jax.block_until_ready((ch_out, cc_out))

    assert ch_out.shape == (B, Ch, Hs, Ws)
    assert cc_out.shape == (B, Ch, Hs, Ws)

    # Sanity check against the pure-JAX reference (loose tol: MXU f32 passes).
    ch_ref, cc_ref = convlstm_cell_reference(raw, x, h, c)
    assert float(jnp.max(jnp.abs(ch_out - ch_ref))) < 5e-2
    assert float(jnp.max(jnp.abs(cc_out - cc_ref))) < 5e-2

    print("KERNEL_OK")
</pallas_src>

<mosaic_0001>
module attributes {stable_mosaic.version = 11 : i64} {
  func.func @_convlstm_cell_kernel(%arg0: i32, %arg1: memref<32x36xf32, #tpu.memory_space<vmem>>, %arg2: memref<32x72xf32, #tpu.memory_space<vmem>>, %arg3: memref<32x1xf32, #tpu.memory_space<vmem>>, %arg4: memref<36x256xf32, #tpu.memory_space<vmem>>, %arg5: memref<72x256xf32, #tpu.memory_space<vmem>>, %arg6: memref<8x256xf32, #tpu.memory_space<vmem>>, %arg7: memref<8x256xf32, #tpu.memory_space<vmem>>, %arg8: memref<8x256xf32, #tpu.memory_space<vmem>>, %arg9: memref<8x256xf32, #tpu.memory_space<vmem>>, %arg10: memref<8x256xf32, #tpu.memory_space<vmem>>, %arg11: memref<8x256xf32, #tpu.memory_space<vmem>>) attributes {dimension_semantics = [#tpu.dimension_semantics<parallel>], iteration_bounds = array<i64: 2>, scalar_prefetch = 0 : i64, scratch_operands = 0 : i64, tpu.core_type = #tpu.core_type<tc>, window_params = [{pipeline_mode = #tpu.pipeline_mode<synchronous>, transform_indices = @transform_0, window_bounds = array<i64: 32, 36>}, {pipeline_mode = #tpu.pipeline_mode<synchronous>, transform_indices = @transform_1, window_bounds = array<i64: 32, 72>}, {pipeline_mode = #tpu.pipeline_mode<synchronous>, transform_indices = @transform_2, window_bounds = array<i64: 32, 1>}, {transform_indices = @transform_3, window_bounds = array<i64: 36, 256>}, {transform_indices = @transform_4, window_bounds = array<i64: 72, 256>}, {transform_indices = @transform_5, window_bounds = array<i64: 8, 256>}, {transform_indices = @transform_6, window_bounds = array<i64: 8, 256>}, {transform_indices = @transform_7, window_bounds = array<i64: 8, 256>}, {transform_indices = @transform_8, window_bounds = array<i64: 8, 256>}, {transform_indices = @transform_9, window_bounds = array<i64: 8, 256>}, {transform_indices = @transform_10, window_bounds = array<i64: 8, 256>}]} {
    %c0 = arith.constant 0 : index
    %c0_0 = arith.constant 0 : index
    %0 = vector.load %arg1[%c0, %c0_0] : memref<32x36xf32, #tpu.memory_space<vmem>>, vector<32x36xf32>
    %c0_1 = arith.constant 0 : index
    %c0_2 = arith.constant 0 : index
    %1 = vector.load %arg4[%c0_1, %c0_2] : memref<36x256xf32, #tpu.memory_space<vmem>>, vector<36x256xf32>
    %cst = arith.constant dense<0.000000e+00> : vector<32x256xf32>
    %2 = tpu.matmul %0, %1, %cst {dimension_numbers = #tpu.dot_dimension_numbers<[1], [0], [0], [1], [0, 0, 1, 1], [], []>} : vector<32x36xf32>, vector<36x256xf32>, vector<32x256xf32> -> vector<32x256xf32>
    %c0_3 = arith.constant 0 : index
    %c0_4 = arith.constant 0 : index
    %3 = vector.load %arg2[%c0_3, %c0_4] : memref<32x72xf32, #tpu.memory_space<vmem>>, vector<32x72xf32>
    %c0_5 = arith.constant 0 : index
    %c0_6 = arith.constant 0 : index
    %4 = vector.load %arg5[%c0_5, %c0_6] : memref<72x256xf32, #tpu.memory_space<vmem>>, vector<72x256xf32>
    %cst_7 = arith.constant dense<0.000000e+00> : vector<32x256xf32>
    %5 = tpu.matmul %3, %4, %cst_7 {dimension_numbers = #tpu.dot_dimension_numbers<[1], [0], [0], [1], [0, 0, 1, 1], [], []>} : vector<32x72xf32>, vector<72x256xf32>, vector<32x256xf32> -> vector<32x256xf32>
    %6 = arith.addf %2, %5 : vector<32x256xf32>
    %c0_8 = arith.constant 0 : index
    %c0_9 = arith.constant 0 : index
    %7 = vector.load %arg3[%c0_8, %c0_9] : memref<32x1xf32, #tpu.memory_space<vmem>>, vector<32x1xf32>
    %8 = vector.broadcast %7 : vector<32x1xf32> to vector<32x256xf32>
    %9 = arith.addf %6, %8 : vector<32x256xf32>
    %c0_10 = arith.constant 0 : index
    %c0_11 = arith.constant 0 : index
    %10 = vector.load %arg6[%c0_10, %c0_11] : memref<8x256xf32, #tpu.memory_space<vmem>>, vector<8x256xf32>
    %11 = vector.extract_strided_slice %9 {offsets = [0, 0], sizes = [8, 256], strides = [1, 1]} : vector<32x256xf32> to vector<8x256xf32>
    %c0_12 = arith.constant 0 : index
    %c0_13 = arith.constant 0 : index
    %12 = vector.load %arg7[%c0_12, %c0_13] : memref<8x256xf32, #tpu.memory_space<vmem>>, vector<8x256xf32>
    %13 = arith.mulf %10, %12 : vector<8x256xf32>
    %14 = arith.addf %11, %13 : vector<8x256xf32>
    %15 = arith.negf %14 : vector<8x256xf32>
    %16 = math.exp %15 : vector<8x256xf32>
    %cst_14 = arith.constant 1.000000e+00 : f32
    %17 = vector.broadcast %cst_14 : f32 to vector<8x256xf32>
    %18 = arith.addf %17, %16 : vector<8x256xf32>
    %19 = arith.divf %17, %18 : vector<8x256xf32>
    %20 = vector.extract_strided_slice %9 {offsets = [8, 0], sizes = [8, 256], strides = [1, 1]} : vector<32x256xf32> to vector<8x256xf32>
    %c0_15 = arith.constant 0 : index
    %c0_16 = arith.constant 0 : index
    %21 = vector.load %arg8[%c0_15, %c0_16] : memref<8x256xf32, #tpu.memory_space<vmem>>, vector<8x256xf32>
    %22 = arith.mulf %10, %21 : vector<8x256xf32>
    %23 = arith.addf %20, %22 : vector<8x256xf32>
    %24 = arith.negf %23 : vector<8x256xf32>
    %25 = math.exp %24 : vector<8x256xf32>
    %cst_17 = arith.constant 1.000000e+00 : f32
    %26 = vector.broadcast %cst_17 : f32 to vector<8x256xf32>
    %27 = arith.addf %26, %25 : vector<8x256xf32>
    %28 = arith.divf %26, %27 : vector<8x256xf32>
    %29 = arith.mulf %28, %10 : vector<8x256xf32>
    %30 = vector.extract_strided_slice %9 {offsets = [16, 0], sizes = [8, 256], strides = [1, 1]} : vector<32x256xf32> to vector<8x256xf32>
    %31 = math.tanh %30 : vector<8x256xf32>
    %32 = arith.mulf %19, %31 : vector<8x256xf32>
    %33 = arith.addf %29, %32 : vector<8x256xf32>
    %34 = vector.extract_strided_slice %9 {offsets = [24, 0], sizes = [8, 256], strides = [1, 1]} : vector<32x256xf32> to vector<8x256xf32>
    %c0_18 = arith.constant 0 : index
    %c0_19 = arith.constant 0 : index
    %35 = vector.load %arg9[%c0_18, %c0_19] : memref<8x256xf32, #tpu.memory_space<vmem>>, vector<8x256xf32>
    %36 = arith.mulf %33, %35 : vector<8x256xf32>
    %37 = arith.addf %34, %36 : vector<8x256xf32>
    %38 = arith.negf %37 : vector<8x256xf32>
    %39 = math.exp %38 : vector<8x256xf32>
    %cst_20 = arith.constant 1.000000e+00 : f32
    %40 = vector.broadcast %cst_20 : f32 to vector<8x256xf32>
    %41 = arith.addf %40, %39 : vector<8x256xf32>
    %42 = arith.divf %40, %41 : vector<8x256xf32>
    %43 = math.tanh %33 : vector<8x256xf32>
    %44 = arith.mulf %42, %43 : vector<8x256xf32>
    %c0_21 = arith.constant 0 : index
    %c0_22 = arith.constant 0 : index
    %45 = vector.load %arg10[%c0_21, %c0_22] : memref<8x256xf32, #tpu.memory_space<vmem>>, vector<8x256xf32>
    tpu.vector_store %arg10[%c0_21, %c0_22], %44 {strides = array<i32>} : memref<8x256xf32, #tpu.memory_space<vmem>>, vector<8x256xf32>,
    %c0_23 = arith.constant 0 : index
    %c0_24 = arith.constant 0 : index
    %46 = vector.load %arg11[%c0_23, %c0_24] : memref<8x256xf32, #tpu.memory_space<vmem>>, vector<8x256xf32>
    tpu.vector_store %arg11[%c0_23, %c0_24], %33 {strides = array<i32>} : memref<8x256xf32, #tpu.memory_space<vmem>>, vector<8x256xf32>,
    return
  }
  func.func @transform_0(%arg0: i32) -> (i32, i32) {
    %c0_i32 = arith.constant 0 : i32
    %c0_i32_0 = arith.constant 0 : i32
    %c0_i32_1 = arith.constant 0 : i32
    return %c0_i32, %c0_i32_0 : i32, i32
  }
  func.func @transform_1(%arg0: i32) -> (i32, i32) {
    %c0_i32 = arith.constant 0 : i32
    %c0_i32_0 = arith.constant 0 : i32
    %c0_i32_1 = arith.constant 0 : i32
    return %c0_i32, %c0_i32_0 : i32, i32
  }
  func.func @transform_2(%arg0: i32) -> (i32, i32) {
    %c0_i32 = arith.constant 0 : i32
    %c0_i32_0 = arith.constant 0 : i32
    %c0_i32_1 = arith.constant 0 : i32
    return %c0_i32, %c0_i32_0 : i32, i32
  }
  func.func @transform_3(%arg0: i32) -> (i32, i32) {
    %c0_i32 = arith.constant 0 : i32
    %c0_i32_0 = arith.constant 0 : i32
    return %c0_i32, %arg0 : i32, i32
  }
  func.func @transform_4(%arg0: i32) -> (i32, i32) {
    %c0_i32 = arith.constant 0 : i32
    %c0_i32_0 = arith.constant 0 : i32
    return %c0_i32, %arg0 : i32, i32
  }
  func.func @transform_5(%arg0: i32) -> (i32, i32) {
    %c0_i32 = arith.constant 0 : i32
    %c0_i32_0 = arith.constant 0 : i32
    return %c0_i32, %arg0 : i32, i32
  }
  func.func @transform_6(%arg0: i32) -> (i32, i32) {
    %c0_i32 = arith.constant 0 : i32
    %c0_i32_0 = arith.constant 0 : i32
    return %c0_i32, %arg0 : i32, i32
  }
  func.func @transform_7(%arg0: i32) -> (i32, i32) {
    %c0_i32 = arith.constant 0 : i32
    %c0_i32_0 = arith.constant 0 : i32
    return %c0_i32, %arg0 : i32, i32
  }
  func.func @transform_8(%arg0: i32) -> (i32, i32) {
    %c0_i32 = arith.constant 0 : i32
    %c0_i32_0 = arith.constant 0 : i32
    return %c0_i32, %arg0 : i32, i32
  }
  func.func @transform_9(%arg0: i32) -> (i32, i32) {
    %c0_i32 = arith.constant 0 : i32
    %c0_i32_0 = arith.constant 0 : i32
    return %c0_i32, %arg0 : i32, i32
  }
  func.func @transform_10(%arg0: i32) -> (i32, i32) {
    %c0_i32 = arith.constant 0 : i32
    %c0_i32_0 = arith.constant 0 : i32
    return %c0_i32, %arg0 : i32, i32
  }
}

</mosaic_0001>

<llo_original>
// kernel: convlstm_cell_forward.1
$region0: #{convlstm_cell_forward.1}
  #allocation0 [shape = 'u32[]', space=smem, size = 0x4, offset = 0x4, fixed_abs, tag = 'smem constant byte address 0x4 - core index']
  #allocation1 [shape = 'u32[144,128]{1,0:T(1,128)}', space=vmem, size = 0x12000, scoped, tag = 'internal scratch']
  %s0 = inlined_call_operand.vmem [shape: f32[32,36], index: 0, kind: input, shape index: {}]
  %s1 = inlined_call_operand.vmem [shape: f32[32,72], index: 1, kind: input, shape index: {}]
  %s2 = inlined_call_operand.vmem [shape: f32[32,1], index: 2, kind: input, shape index: {}]
  %s3 = inlined_call_operand.vmem [shape: f32[36,512], index: 3, kind: input, shape index: {}]
  %s4 = inlined_call_operand.vmem [shape: f32[72,512], index: 4, kind: input, shape index: {}]
  %s5 = inlined_call_operand.vmem [shape: f32[8,512], index: 5, kind: input, shape index: {}]
  %s6 = inlined_call_operand.vmem [shape: f32[8,512], index: 6, kind: input, shape index: {}]
  %s7 = inlined_call_operand.vmem [shape: f32[8,512], index: 7, kind: input, shape index: {}]
  %s8 = inlined_call_operand.vmem [shape: f32[8,512], index: 8, kind: input, shape index: {}]
  %s9 = inlined_call_operand.vmem [shape: f32[8,512], index: 9, kind: output, shape index: {0}]
  %s10 = inlined_call_operand.vmem [shape: f32[8,512], index: 10, kind: output, shape index: {1}]
  %11 = xla_tuple %s9, %s10
  %s12 = sld [smem:[#allocation0]]
  $region123: #{convlstm_cell_forward.1} parent=0
    _
  %s14 = ssub.s32 1, %s12
  %s15 = scalar_select 0, %s14, %s12
  $region1: #{convlstm_cell_forward.1} parent=0
    #allocation2 [shape = 'u8[81920]{0}', space=vmem, size = 0x14000, scoped, tag = 'input window, operand 3']
    #allocation3 [shape = 'u8[147456]{0}', space=vmem, size = 0x24000, scoped, tag = 'input window, operand 4']
    loop: start=0, step=1, limit=4
    $region2: #{convlstm_cell_forward.1} parent=1 // loop_pre_header
      _
    $region3: #{convlstm_cell_forward.1} parent=1 // loop_header
      %s17 = sphi 0, %s21
      %p18 = scmp.ge.s32.totalorder %s17, 4
      %s25 = sphi 0, %s25
      %s27 = sphi 0, %s25
      %s28 = sphi 0, %s27
      %s42 = sphi 0, %s28
      %s46 = sphi 0, %s46
      %s48 = sphi 0, %s46
      %s49 = sphi 0, %s48
      %s63 = sphi 0, %s49
      %s67 = sphi 0, %s67
      %s69 = sphi 0, %s67
      %s70 = sphi 0, %s69
      %s84 = sphi 0, %s70
      %s90 = sphi 0, %s92
      %s93 = sphi 0, %s90
      %s94 = sphi 0, %s93
      %s110 = sphi 0, %s94
      %s116 = sphi 0, %s118
      %s119 = sphi 0, %s116
      %s120 = sphi 0, %s119
      %s136 = sphi 0, %s120
      %s142 = sphi 0, %s144
      %s145 = sphi 0, %s142
      %s146 = sphi 0, %s145
      %s162 = sphi 0, %s146
      %s168 = sphi 0, %s170
      %s171 = sphi 0, %s168
      %s172 = sphi 0, %s171
      %s188 = sphi 0, %s172
      %s194 = sphi 0, %s196
      %s197 = sphi 0, %s194
      %s198 = sphi 0, %s197
      %s214 = sphi 0, %s198
      %s220 = sphi 0, %s222
      %s223 = sphi 0, %s220
      %s224 = sphi 0, %s223
      %s240 = sphi 0, %s224
      %s246 = sphi 0, %s248
      %s249 = sphi 0, %s246
      %s250 = sphi 0, %s249
      %s266 = sphi 0, %s250
      %s272 = sphi 0, %s274
      %s275 = sphi 0, %s272
      %s276 = sphi 0, %s275
      %s292 = sphi 0, %s276
    $region4: #{convlstm_cell_forward.1} parent=1 // loop_header_branch
      %20 = sbr.rel (%p18) target = $region8
    $region5: #{convlstm_cell_forward.1} parent=1 // loop_body
      %s22 = ssub.s32 %s17, 1
      %s23 = ssub.s32 %s17, 2
      %s24 = sadd.s32 %s17, 1
      %s26 = sadd.s32 %s25, 1
      %p29 = scmp.eq.s32.totalorder %s17, 1
      %p30 = scmp.ne.s32.totalorder %s25, %s27
      %p31 = scmp.eq.s32.totalorder %s17, 0
      %p32 = por %p30, %p31
      %p33 = scmp.ne.s32.totalorder %s25, %s27
      %p34 = scmp.eq.s32.totalorder %s22, 1
      %p35 = por %p33, %p34
      %p36 = scmp.ne.s32.totalorder %s27, %s28
      %p37 = scmp.eq.s32.totalorder %s22, 0
      %p38 = por %p36, %p37
      %p39 = scmp.ne.s32.totalorder %s27, %s28
      %p40 = scmp.eq.s32.totalorder %s23, 1
      %p41 = por %p39, %p40
      %p43 = scmp.ne.s32.totalorder %s28, %s42
      %p44 = scmp.eq.s32.totalorder %s23, 0
      %p45 = por %p43, %p44
      %s47 = sadd.s32 %s46, 1
      %p50 = scmp.eq.s32.totalorder %s17, 1
      %p51 = scmp.ne.s32.totalorder %s46, %s48
      %p52 = scmp.eq.s32.totalorder %s17, 0
      %p53 = por %p51, %p52
      %p54 = scmp.ne.s32.totalorder %s46, %s48
      %p55 = scmp.eq.s32.totalorder %s22, 1
      %p56 = por %p54, %p55
      %p57 = scmp.ne.s32.totalorder %s48, %s49
      %p58 = scmp.eq.s32.totalorder %s22, 0
      %p59 = por %p57, %p58
      %p60 = scmp.ne.s32.totalorder %s48, %s49
      %p61 = scmp.eq.s32.totalorder %s23, 1
      %p62 = por %p60, %p61
      %p64 = scmp.ne.s32.totalorder %s49, %s63
      %p65 = scmp.eq.s32.totalorder %s23, 0
      %p66 = por %p64, %p65
      %s68 = sadd.s32 %s67, 1
      %p71 = scmp.eq.s32.totalorder %s17, 1
      %p72 = scmp.ne.s32.totalorder %s67, %s69
      %p73 = scmp.eq.s32.totalorder %s17, 0
      %p74 = por %p72, %p73
      %p75 = scmp.ne.s32.totalorder %s67, %s69
      %p76 = scmp.eq.s32.totalorder %s22, 1
      %p77 = por %p75, %p76
      %p78 = scmp.ne.s32.totalorder %s69, %s70
      %p79 = scmp.eq.s32.totalorder %s22, 0
      %p80 = por %p78, %p79
      %p81 = scmp.ne.s32.totalorder %s69, %s70
      %p82 = scmp.eq.s32.totalorder %s23, 1
      %p83 = por %p81, %p82
      %p85 = scmp.ne.s32.totalorder %s70, %s84
      %p86 = scmp.eq.s32.totalorder %s23, 0
      %p87 = por %p85, %p86
      %s88 = ssub.s32 %s17, %s24
      %p89 = scmp.eq.s32.totalorder %s88, 0
      %s91 = sadd.s32 %s90, 1
      %s92 = scalar_select %p89, %s90, %s91
      %p95 = pneg %p89
      %p96 = scmp.eq.s32.totalorder %s17, 1
      %p97 = por %p95, %p96
      %p98 = scmp.ne.s32.totalorder %s90, %s93
      %p99 = scmp.eq.s32.totalorder %s17, 0
      %p100 = por %p98, %p99
      %p101 = scmp.ne.s32.totalorder %s90, %s93
      %p102 = scmp.eq.s32.totalorder %s22, 1
      %p103 = por %p101, %p102
      %p104 = scmp.ne.s32.totalorder %s93, %s94
      %p105 = scmp.eq.s32.totalorder %s22, 0
      %p106 = por %p104, %p105
      %p107 = scmp.ne.s32.totalorder %s93, %s94
      %p108 = scmp.eq.s32.totalorder %s23, 1
      %p109 = por %p107, %p108
      %p111 = scmp.ne.s32.totalorder %s94, %s110
      %p112 = scmp.eq.s32.totalorder %s23, 0
      %p113 = por %p111, %p112
      %s114 = ssub.s32 %s17, %s24
      %p115 = scmp.eq.s32.totalorder %s114, 0
      %s117 = sadd.s32 %s116, 1
      %s118 = scalar_select %p115, %s116, %s117
      %p121 = pneg %p115
      %p122 = scmp.eq.s32.totalorder %s17, 1
      %p123 = por %p121, %p122
      %p124 = scmp.ne.s32.totalorder %s116, %s119
      %p125 = scmp.eq.s32.totalorder %s17, 0
      %p126 = por %p124, %p125
      %p127 = scmp.ne.s32.totalorder %s116, %s119
      %p128 = scmp.eq.s32.totalorder %s22, 1
      %p129 = por %p127, %p128
      %p130 = scmp.ne.s32.totalorder %s119, %s120
      %p131 = scmp.eq.s32.totalorder %s22, 0
      %p132 = por %p130, %p131
      %p133 = scmp.ne.s32.totalorder %s119, %s120
      %p134 = scmp.eq.s32.totalorder %s23, 1
      %p135 = por %p133, %p134
      %p137 = scmp.ne.s32.totalorder %s120, %s136
      %p138 = scmp.eq.s32.totalorder %s23, 0
      %p139 = por %p137, %p138
      %s140 = ssub.s32 %s17, %s24
      %p141 = scmp.eq.s32.totalorder %s140, 0
      %s143 = sadd.s32 %s142, 1
      %s144 = scalar_select %p141, %s142, %s143
      %p147 = pneg %p141
      %p148 = scmp.eq.s32.totalorder %s17, 1
      %p149 = por %p147, %p148
      %p150 = scmp.ne.s32.totalorder %s142, %s145
      %p151 = scmp.eq.s32.totalorder %s17, 0
      %p152 = por %p150, %p151
      %p153 = scmp.ne.s32.totalorder %s142, %s145
      %p154 = scmp.eq.s32.totalorder %s22, 1
      %p155 = por %p153, %p154
      %p156 = scmp.ne.s32.totalorder %s145, %s146
      %p157 = scmp.eq.s32.totalorder %s22, 0
      %p158 = por %p156, %p157
      %p159 = scmp.ne.s32.totalorder %s145, %s146
      %p160 = scmp.eq.s32.totalorder %s23, 1
      %p161 = por %p159, %p160
      %p163 = scmp.ne.s32.totalorder %s146, %s162
      %p164 = scmp.eq.s32.totalorder %s23, 0
      %p165 = por %p163, %p164
      %s166 = ssub.s32 %s17, %s24
      %p167 = scmp.eq.s32.totalorder %s166, 0
      %s169 = sadd.s32 %s168, 1
      %s170 = scalar_select %p167, %s168, %s169
      %p173 = pneg %p167
      %p174 = scmp.eq.s32.totalorder %s17, 1
      %p175 = por %p173, %p174
      %p176 = scmp.ne.s32.totalorder %s168, %s171
      %p177 = scmp.eq.s32.totalorder %s17, 0
      %p178 = por %p176, %p177
      %p179 = scmp.ne.s32.totalorder %s168, %s171
      %p180 = scmp.eq.s32.totalorder %s22, 1
      %p181 = por %p179, %p180
      %p182 = scmp.ne.s32.totalorder %s171, %s172
      %p183 = scmp.eq.s32.totalorder %s22, 0
      %p184 = por %p182, %p183
      %p185 = scmp.ne.s32.totalorder %s171, %s172
      %p186 = scmp.eq.s32.totalorder %s23, 1
      %p187 = por %p185, %p186
      %p189 = scmp.ne.s32.totalorder %s172, %s188
      %p190 = scmp.eq.s32.totalorder %s23, 0
      %p191 = por %p189, %p190
      %s192 = ssub.s32 %s17, %s24
      %p193 = scmp.eq.s32.totalorder %s192, 0
      %s195 = sadd.s32 %s194, 1
      %s196 = scalar_select %p193, %s194, %s195
      %p199 = pneg %p193
      %p200 = scmp.eq.s32.totalorder %s17, 1
      %p201 = por %p199, %p200
      %p202 = scmp.ne.s32.totalorder %s194, %s197
      %p203 = scmp.eq.s32.totalorder %s17, 0
      %p204 = por %p202, %p203
      %p205 = scmp.ne.s32.totalorder %s194, %s197
      %p206 = scmp.eq.s32.totalorder %s22, 1
      %p207 = por %p205, %p206
      %p208 = scmp.ne.s32.totalorder %s197, %s198
      %p209 = scmp.eq.s32.totalorder %s22, 0
      %p210 = por %p208, %p209
      %p211 = scmp.ne.s32.totalorder %s197, %s198
      %p212 = scmp.eq.s32.totalorder %s23, 1
      %p213 = por %p211, %p212
      %p215 = scmp.ne.s32.totalorder %s198, %s214
      %p216 = scmp.eq.s32.totalorder %s23, 0
      %p217 = por %p215, %p216
      %s218 = ssub.s32 %s17, %s24
      %p219 = scmp.eq.s32.totalorder %s218, 0
      %s221 = sadd.s32 %s220, 1
      %s222 = scalar_select %p219, %s220, %s221
      %p225 = pneg %p219
      %p226 = scmp.eq.s32.totalorder %s17, 1
      %p227 = por %p225, %p226
      %p228 = scmp.ne.s32.totalorder %s220, %s223
      %p229 = scmp.eq.s32.totalorder %s17, 0
      %p230 = por %p228, %p229
      %p231 = scmp.ne.s32.totalorder %s220, %s223
      %p232 = scmp.eq.s32.totalorder %s22, 1
      %p233 = por %p231, %p232
      %p234 = scmp.ne.s32.totalorder %s223, %s224
      %p235 = scmp.eq.s32.totalorder %s22, 0
      %p236 = por %p234, %p235
      %p237 = scmp.ne.s32.totalorder %s223, %s224
      %p238 = scmp.eq.s32.totalorder %s23, 1
      %p239 = por %p237, %p238
      %p241 = scmp.ne.s32.totalorder %s224, %s240
      %p242 = scmp.eq.s32.totalorder %s23, 0
      %p243 = por %p241, %p242
      %s244 = ssub.s32 %s17, %s24
      %p245 = scmp.eq.s32.totalorder %s244, 0
      %s247 = sadd.s32 %s246, 1
      %s248 = scalar_select %p245, %s246, %s247
      %p251 = pneg %p245
      %p252 = scmp.eq.s32.totalorder %s17, 1
      %p253 = por %p251, %p252
      %p254 = scmp.ne.s32.totalorder %s246, %s249
      %p255 = scmp.eq.s32.totalorder %s17, 0
      %p256 = por %p254, %p255
      %p257 = scmp.ne.s32.totalorder %s246, %s249
      %p258 = scmp.eq.s32.totalorder %s22, 1
      %p259 = por %p257, %p258
      %p260 = scmp.ne.s32.totalorder %s249, %s250
      %p261 = scmp.eq.s32.totalorder %s22, 0
      %p262 = por %p260, %p261
      %p263 = scmp.ne.s32.totalorder %s249, %s250
      %p264 = scmp.eq.s32.totalorder %s23, 1
      %p265 = por %p263, %p264
      %p267 = scmp.ne.s32.totalorder %s250, %s266
      %p268 = scmp.eq.s32.totalorder %s23, 0
      %p269 = por %p267, %p268
      %s270 = ssub.s32 %s17, %s24
      %p271 = scmp.eq.s32.totalorder %s270, 0
      %s273 = sadd.s32 %s272, 1
      %s274 = scalar_select %p271, %s272, %s273
      %p277 = pneg %p271
      %p278 = scmp.eq.s32.totalorder %s17, 1
      %p279 = por %p277, %p278
      %p280 = scmp.ne.s32.totalorder %s272, %s275
      %p281 = scmp.eq.s32.totalorder %s17, 0
      %p282 = por %p280, %p281
      %p283 = scmp.ne.s32.totalorder %s272, %s275
      %p284 = scmp.eq.s32.totalorder %s22, 1
      %p285 = por %p283, %p284
      %p286 = scmp.ne.s32.totalorder %s275, %s276
      %p287 = scmp.eq.s32.totalorder %s22, 0
      %p288 = por %p286, %p287
      %p289 = scmp.ne.s32.totalorder %s275, %s276
      %p290 = scmp.eq.s32.totalorder %s23, 1
      %p291 = por %p289, %p290
      %p293 = scmp.ne.s32.totalorder %s276, %s292
      %p294 = scmp.eq.s32.totalorder %s23, 0
      %p295 = por %p293, %p294
      %p296 = scmp.le.s32.totalorder 1, %s17
      %p297 = scmp.lt.s32.totalorder %s17, 3
      %p298 = pnand %p296, %p297
      %p299 = pneg %p298
      // Predicated region
      $region9: #{convlstm_cell_forward.1} parent=5 // pred_check
        _
      $region10: #{convlstm_cell_forward.1} parent=5 // pred_check_branch
        %301 = sbr.rel (%p298) target = $region12
      $region11: #{convlstm_cell_forward.1} parent=5 // pred_region
        %s302 = ssub.s32 %s17, 1
        // Predicated region
        $region13: #{convlstm_cell_forward.1} parent=11 // pred_check
          %p303 = pneg %p38
        $region14: #{convlstm_cell_forward.1} parent=11 // pred_check_branch
          %305 = sbr.rel (%p303) target = $region16
        $region15: #{convlstm_cell_forward.1} parent=11 // pred_region
          _
        $region16: #{convlstm_cell_forward.1} parent=11 // pred_fallthru
          _
        // Predicated region
        $region17: #{convlstm_cell_forward.1} parent=11 // pred_check
          %p306 = pneg %p59
        $region18: #{convlstm_cell_forward.1} parent=11 // pred_check_branch
          %308 = sbr.rel (%p306) target = $region20
        $region19: #{convlstm_cell_forward.1} parent=11 // pred_region
          _
        $region20: #{convlstm_cell_forward.1} parent=11 // pred_fallthru
          _
        // Predicated region
        $region21: #{convlstm_cell_forward.1} parent=11 // pred_check
          %p309 = pneg %p80
        $region22: #{convlstm_cell_forward.1} parent=11 // pred_check_branch
          %311 = sbr.rel (%p309) target = $region24
        $region23: #{convlstm_cell_forward.1} parent=11 // pred_region
          _
        $region24: #{convlstm_cell_forward.1} parent=11 // pred_fallthru
          _
      $region12: #{convlstm_cell_forward.1} parent=5 // pred_fallthru
        _
      %p312 = scmp.lt.s32.totalorder %s17, 2
      // Predicated region
      $region25: #{convlstm_cell_forward.1} parent=5 // pred_check
        %p313 = pneg %p312
      $region26: #{convlstm_cell_forward.1} parent=5 // pred_check_branch
        %315 = sbr.rel (%p313) target = $region28
      $region27: #{convlstm_cell_forward.1} parent=5 // pred_region
        // Predicated region
        $region29: #{convlstm_cell_forward.1} parent=27 // pred_check
          %p316 = pneg %p100
        $region30: #{convlstm_cell_forward.1} parent=27 // pred_check_branch
          %318 = sbr.rel (%p316) target = $region32
        $region31: #{convlstm_cell_forward.1} parent=27 // pred_region
          %s319 = sand.u32 %s90, 1
          %s320 = sand.u32 %s90, 1
          %s321 = smul.addr %s320, 80
          %s322 = scalar_lea.vmem [#allocation2], %s321
          %s323 = smul.u32 2, %s17
          %s324 = smul.addr %s323, 8
          %s325 = scalar_lea.vmem %s3, %s324
          // Predicated region
          $region33: #{convlstm_cell_forward.1} parent=31 // pred_check
            _
          $region34: #{convlstm_cell_forward.1} parent=31 // pred_check_branch
            %327 = sbr.rel (0) target = $region36
          $region35: #{convlstm_cell_forward.1} parent=31 // pred_region
            // Predicated region
            $region37: #{convlstm_cell_forward.1} parent=35 // pred_check
              _
            $region38: #{convlstm_cell_forward.1} parent=35 // pred_check_branch
              %329 = sbr.rel (0) target = $region40
            $region39: #{convlstm_cell_forward.1} parent=35 // pred_region
              loop: start=0, step=1, limit=1
              $region41: #{convlstm_cell_forward.1} parent=39 // loop_pre_header
                _
              $region42: #{convlstm_cell_forward.1} parent=39 // loop_header
                %s331 = sphi 0, %s335
                %p332 = scmp.ge.s32.totalorder %s331, 1
                %s336 = sphi %s325, %s325
                %s337 = sphi %s322, %s322
              $region43: #{convlstm_cell_forward.1} parent=39 // loop_header_branch
                %334 = sbr.rel (%p332) target = $region47
              $region44: #{convlstm_cell_forward.1} parent=39 // loop_body
                %v338 = vld [vmem:[%s336] sm:$0xff]
                %339 = vst [vmem:[%s337] sm:$0xff] %v338
                %v340 = vld [vmem:[%s336 + $0x8] sm:$0xff]
                %341 = vst [vmem:[%s337 + $0x8] sm:$0xff] %v340
                %v342 = vld [vmem:[%s336 + $0x20] sm:$0xff]
                %343 = vst [vmem:[%s337 + $0x10] sm:$0xff] %v342
                %v344 = vld [vmem:[%s336 + $0x28] sm:$0xff]
                %345 = vst [vmem:[%s337 + $0x18] sm:$0xff] %v344
                %v346 = vld [vmem:[%s336 + $0x40] sm:$0xff]
                %347 = vst [vmem:[%s337 + $0x20] sm:$0xff] %v346
                %v348 = vld [vmem:[%s336 + $0x48] sm:$0xff]
                %349 = vst [vmem:[%s337 + $0x28] sm:$0xff] %v348
                %v350 = vld [vmem:[%s336 + $0x60] sm:$0xff]
                %351 = vst [vmem:[%s337 + $0x30] sm:$0xff] %v350
                %v352 = vld [vmem:[%s336 + $0x68] sm:$0xff]
                %353 = vst [vmem:[%s337 + $0x38] sm:$0xff] %v352
                %v354 = vld [vmem:[%s336 + $0x80] sm:$0xff]
                %355 = vst [vmem:[%s337 + $0x40] sm:$0xff] %v354
                %v356 = vld [vmem:[%s336 + $0x88] sm:$0xff]
                %357 = vst [vmem:[%s337 + $0x48] sm:$0xff] %v356
              $region45: #{convlstm_cell_forward.1} parent=39 // loop_footer
                %s335 = sadd.s32 1, %s331
              $region46: #{convlstm_cell_forward.1} parent=39 // loop_footer_branch
                %330 = sbr.rel target = $region42
              $region47: #{convlstm_cell_forward.1} parent=39 // loop_exit
                _
            $region40: #{convlstm_cell_forward.1} parent=35 // pred_fallthru
              _
            // Predicated region
            $region48: #{convlstm_cell_forward.1} parent=35 // pred_check
              _
            $region49: #{convlstm_cell_forward.1} parent=35 // pred_check_branch
              %359 = sbr.rel target = $region51
            $region50: #{convlstm_cell_forward.1} parent=35 // pred_region
              _
            $region51: #{convlstm_cell_forward.1} parent=35 // pred_fallthru
              _
          $region36: #{convlstm_cell_forward.1} parent=31 // pred_fallthru
            _
          %360 = vnop
        $region32: #{convlstm_cell_forward.1} parent=27 // pred_fallthru
          _
        // Predicated region
        $region52: #{convlstm_cell_forward.1} parent=27 // pred_check
          %p361 = pneg %p126
        $region53: #{convlstm_cell_forward.1} parent=27 // pred_check_branch
          %363 = sbr.rel (%p361) target = $region55
        $region54: #{convlstm_cell_forward.1} parent=27 // pred_region
          %s364 = sand.u32 %s116, 1
          %s365 = sand.u32 %s116, 1
          %s366 = smul.addr %s365, 144
          %s367 = scalar_lea.vmem [#allocation3], %s366
          %s368 = smul.u32 2, %s17
          %s369 = smul.addr %s368, 8
          %s370 = scalar_lea.vmem %s4, %s369
          // Predicated region
          $region56: #{convlstm_cell_forward.1} parent=54 // pred_check
            _
          $region57: #{convlstm_cell_forward.1} parent=54 // pred_check_branch
            %372 = sbr.rel (0) target = $region59
          $region58: #{convlstm_cell_forward.1} parent=54 // pred_region
            // Predicated region
            $region60: #{convlstm_cell_forward.1} parent=58 // pred_check
              _
            $region61: #{convlstm_cell_forward.1} parent=58 // pred_check_branch
              %374 = sbr.rel (0) target = $region63
            $region62: #{convlstm_cell_forward.1} parent=58 // pred_region
              loop: start=0, step=1, limit=1
              $region64: #{convlstm_cell_forward.1} parent=62 // loop_pre_header
                _
              $region65: #{convlstm_cell_forward.1} parent=62 // loop_header
                %s376 = sphi 0, %s380
                %p377 = scmp.ge.s32.totalorder %s376, 1
                %s381 = sphi %s370, %s370
                %s382 = sphi %s367, %s367
              $region66: #{convlstm_cell_forward.1} parent=62 // loop_header_branch
                %379 = sbr.rel (%p377) target = $region70
              $region67: #{convlstm_cell_forward.1} parent=62 // loop_body
                %v383 = vld [vmem:[%s381] sm:$0xff]
                %384 = vst [vmem:[%s382] sm:$0xff] %v383
                %v385 = vld [vmem:[%s381 + $0x8] sm:$0xff]
                %386 = vst [vmem:[%s382 + $0x8] sm:$0xff] %v385
                %v387 = vld [vmem:[%s381 + $0x20] sm:$0xff]
                %388 = vst [vmem:[%s382 + $0x10] sm:$0xff] %v387
                %v389 = vld [vmem:[%s381 + $0x28] sm:$0xff]
                %390 = vst [vmem:[%s382 + $0x18] sm:$0xff] %v389
                %v391 = vld [vmem:[%s381 + $0x40] sm:$0xff]
                %392 = vst [vmem:[%s382 + $0x20] sm:$0xff] %v391
                %v393 = vld [vmem:[%s381 + $0x48] sm:$0xff]
                %394 = vst [vmem:[%s382 + $0x28] sm:$0xff] %v393
                %v395 = vld [vmem:[%s381 + $0x60] sm:$0xff]
                %396 = vst [vmem:[%s382 + $0x30] sm:$0xff] %v395
                %v397 = vld [vmem:[%s381 + $0x68] sm:$0xff]
                %398 = vst [vmem:[%s382 + $0x38] sm:$0xff] %v397
                %v399 = vld [vmem:[%s381 + $0x80] sm:$0xff]
                %400 = vst [vmem:[%s382 + $0x40] sm:$0xff] %v399
                %v401 = vld [vmem:[%s381 + $0x88] sm:$0xff]
                %402 = vst [vmem:[%s382 + $0x48] sm:$0xff] %v401
                %v403 = vld [vmem:[%s381 + $0xa0] sm:$0xff]
                %404 = vst [vmem:[%s382 + $0x50] sm:$0xff] %v403
                %v405 = vld [vmem:[%s381 + $0xa8] sm:$0xff]
                %406 = vst [vmem:[%s382 + $0x58] sm:$0xff] %v405
                %v407 = vld [vmem:[%s381 + $0xc0] sm:$0xff]
                %408 = vst [vmem:[%s382 + $0x60] sm:$0xff] %v407
                %v409 = vld [vmem:[%s381 + $0xc8] sm:$0xff]
                %410 = vst [vmem:[%s382 + $0x68] sm:$0xff] %v409
                %v411 = vld [vmem:[%s381 + $0xe0] sm:$0xff]
                %412 = vst [vmem:[%s382 + $0x70] sm:$0xff] %v411
                %v413 = vld [vmem:[%s381 + $0xe8] sm:$0xff]
                %414 = vst [vmem:[%s382 + $0x78] sm:$0xff] %v413
                %v415 = vld [vmem:[%s381 + $0x100] sm:$0xff]
                %416 = vst [vmem:[%s382 + $0x80] sm:$0xff] %v415
                %v417 = vld [vmem:[%s381 + $0x108] sm:$0xff]
                %418 = vst [vmem:[%s382 + $0x88] sm:$0xff] %v417
              $region68: #{convlstm_cell_forward.1} parent=62 // loop_footer
                %s380 = sadd.s32 1, %s376
              $region69: #{convlstm_cell_forward.1} parent=62 // loop_footer_branch
                %375 = sbr.rel target = $region65
              $region70: #{convlstm_cell_forward.1} parent=62 // loop_exit
                _
            $region63: #{convlstm_cell_forward.1} parent=58 // pred_fallthru
              _
            // Predicated region
            $region71: #{convlstm_cell_forward.1} parent=58 // pred_check
              _
            $region72: #{convlstm_cell_forward.1} parent=58 // pred_check_branch
              %420 = sbr.rel target = $region74
            $region73: #{convlstm_cell_forward.1} parent=58 // pred_region
              _
            $region74: #{convlstm_cell_forward.1} parent=58 // pred_fallthru
              _
          $region59: #{convlstm_cell_forward.1} parent=54 // pred_fallthru
            _
          %421 = vnop
        $region55: #{convlstm_cell_forward.1} parent=27 // pred_fallthru
          _
        // Predicated region
        $region75: #{convlstm_cell_forward.1} parent=27 // pred_check
          %p422 = pneg %p152
        $region76: #{convlstm_cell_forward.1} parent=27 // pred_check_branch
          %424 = sbr.rel (%p422) target = $region78
        $region77: #{convlstm_cell_forward.1} parent=27 // pred_region
          %s425 = smul.u32 2, %s17
          %p426 = scmp.lt.s32.totalorder %s425, 3
          %s427 = scalar_select %p426, %s425, 3
          %s428 = smul.addr %s427, 8
          %s429 = scalar_lea.vmem %s5, %s428
          %s430 = smul.u32 2, %s17
        $region78: #{convlstm_cell_forward.1} parent=27 // pred_fallthru
          _
        // Predicated region
        $region79: #{convlstm_cell_forward.1} parent=27 // pred_check
          %p431 = pneg %p178
        $region80: #{convlstm_cell_forward.1} parent=27 // pred_check_branch
          %433 = sbr.rel (%p431) target = $region82
        $region81: #{convlstm_cell_forward.1} parent=27 // pred_region
          %s434 = smul.u32 2, %s17
          %p435 = scmp.lt.s32.totalorder %s434, 3
          %s436 = scalar_select %p435, %s434, 3
          %s437 = smul.addr %s436, 8
          %s438 = scalar_lea.vmem %s6, %s437
          %s439 = smul.u32 2, %s17
        $region82: #{convlstm_cell_forward.1} parent=27 // pred_fallthru
          _
        // Predicated region
        $region83: #{convlstm_cell_forward.1} parent=27 // pred_check
          %p440 = pneg %p204
        $region84: #{convlstm_cell_forward.1} parent=27 // pred_check_branch
          %442 = sbr.rel (%p440) target = $region86
        $region85: #{convlstm_cell_forward.1} parent=27 // pred_region
          %s443 = smul.u32 2, %s17
          %p444 = scmp.lt.s32.totalorder %s443, 3
          %s445 = scalar_select %p444, %s443, 3
          %s446 = smul.addr %s445, 8
          %s447 = scalar_lea.vmem %s7, %s446
          %s448 = smul.u32 2, %s17
        $region86: #{convlstm_cell_forward.1} parent=27 // pred_fallthru
          _
        // Predicated region
        $region87: #{convlstm_cell_forward.1} parent=27 // pred_check
          %p449 = pneg %p230
        $region88: #{convlstm_cell_forward.1} parent=27 // pred_check_branch
          %451 = sbr.rel (%p449) target = $region90
        $region89: #{convlstm_cell_forward.1} parent=27 // pred_region
          %s452 = smul.u32 2, %s17
          %p453 = scmp.lt.s32.totalorder %s452, 3
          %s454 = scalar_select %p453, %s452, 3
          %s455 = smul.addr %s454, 8
          %s456 = scalar_lea.vmem %s8, %s455
          %s457 = smul.u32 2, %s17
        $region90: #{convlstm_cell_forward.1} parent=27 // pred_fallthru
          _
      $region28: #{convlstm_cell_forward.1} parent=5 // pred_fallthru
        _
      %p458 = scmp.le.s32.totalorder 1, %s17
      %p459 = scmp.lt.s32.totalorder %s17, 3
      %p460 = pnand %p458, %p459
      %p461 = pneg %p460
      // Predicated region
      $region91: #{convlstm_cell_forward.1} parent=5 // pred_check
        _
      $region92: #{convlstm_cell_forward.1} parent=5 // pred_check_branch
        %463 = sbr.rel (%p460) target = $region94
      $region93: #{convlstm_cell_forward.1} parent=5 // pred_region
        %s464 = ssub.s32 %s17, 1
        %s465 = sand.u32 %s93, 1
        %s466 = sand.u32 %s93, 1
        %s467 = smul.addr %s466, 80
        %s468 = scalar_lea.vmem [#allocation2], %s467
        // Predicated region
        $region95: #{convlstm_cell_forward.1} parent=93 // pred_check
          %p469 = pneg %p106
        $region96: #{convlstm_cell_forward.1} parent=93 // pred_check_branch
          %471 = sbr.rel (%p469) target = $region98
        $region97: #{convlstm_cell_forward.1} parent=93 // pred_region
          _
        $region98: #{convlstm_cell_forward.1} parent=93 // pred_fallthru
          _
        %s472 = sand.u32 %s119, 1
        %s473 = sand.u32 %s119, 1
        %s474 = smul.addr %s473, 144
        %s475 = scalar_lea.vmem [#allocation3], %s474
        // Predicated region
        $region99: #{convlstm_cell_forward.1} parent=93 // pred_check
          %p476 = pneg %p132
        $region100: #{convlstm_cell_forward.1} parent=93 // pred_check_branch
          %478 = sbr.rel (%p476) target = $region102
        $region101: #{convlstm_cell_forward.1} parent=93 // pred_region
          _
        $region102: #{convlstm_cell_forward.1} parent=93 // pred_fallthru
          _
        %p479 = pneg %p38
        %p480 = pneg %p35
        %p481 = pneg %p59
        %p482 = pneg %p56
        %p483 = pneg %p80
        %p484 = pneg %p77
        %s485 = sand.u32 %s93, 1
        %s486 = sand.u32 %s93, 1
        %s487 = smul.addr %s486, 80
        %s488 = scalar_lea.vmem [#allocation2], %s487
        %p489 = pneg %p106
        %p490 = pneg %p103
        %s491 = sand.u32 %s119, 1
        %s492 = sand.u32 %s119, 1
        %s493 = smul.addr %s492, 144
        %s494 = scalar_lea.vmem [#allocation3], %s493
        %p495 = pneg %p132
        %p496 = pneg %p129
        %s497 = smul.u32 2, %s22
        %p498 = scmp.lt.s32.totalorder %s497, 3
        %s499 = scalar_select %p498, %s497, 3
        %s500 = smul.addr %s499, 8
        %s501 = scalar_lea.vmem %s5, %s500
        %p502 = pneg %p158
        %p503 = pneg %p155
        %s504 = smul.u32 2, %s22
        %p505 = scmp.lt.s32.totalorder %s504, 3
        %s506 = scalar_select %p505, %s504, 3
        %s507 = smul.addr %s506, 8
        %s508 = scalar_lea.vmem %s6, %s507
        %p509 = pneg %p184
        %p510 = pneg %p181
        %s511 = smul.u32 2, %s22
        %p512 = scmp.lt.s32.totalorder %s511, 3
        %s513 = scalar_select %p512, %s511, 3
        %s514 = smul.addr %s513, 8
        %s515 = scalar_lea.vmem %s7, %s514
        %p516 = pneg %p210
        %p517 = pneg %p207
        %s518 = smul.u32 2, %s22
        %p519 = scmp.lt.s32.totalorder %s518, 3
        %s520 = scalar_select %p519, %s518, 3
        %s521 = smul.addr %s520, 8
        %s522 = scalar_lea.vmem %s8, %s521
        %p523 = pneg %p236
        %p524 = pneg %p233
        %p525 = pneg %p262
        %p526 = pneg %p259
        %s527 = smul.u32 2, %s22
        %p528 = scmp.lt.s32.totalorder %s527, 3
        %s529 = scalar_select %p528, %s527, 3
        %s530 = smul.addr %s529, 8
        %s531 = scalar_lea.vmem %s9, %s530
        %p532 = pneg %p288
        %p533 = pneg %p285
        %s534 = smul.u32 2, %s22
        %p535 = scmp.lt.s32.totalorder %s534, 3
        %s536 = scalar_select %p535, %s534, 3
        %s537 = smul.addr %s536, 8
        %s538 = scalar_lea.vmem %s10, %s537
        %s539 = smul.u32 2, %s22
        %s540 = smul.u32 2, %s22
        %s541 = smul.u32 2, %s22
        %p542 = scmp.lt.s32.totalorder %s541, 3
        %s543 = scalar_select %p542, %s541, 3
        %s544 = smul.addr %s543, 8
        %s545 = scalar_lea.vmem %s5, %s544
        %s546 = smul.u32 2, %s22
        %s547 = smul.u32 2, %s22
        %p548 = scmp.lt.s32.totalorder %s547, 3
        %s549 = scalar_select %p548, %s547, 3
        %s550 = smul.addr %s549, 8
        %s551 = scalar_lea.vmem %s6, %s550
        %s552 = smul.u32 2, %s22
        %s553 = smul.u32 2, %s22
        %p554 = scmp.lt.s32.totalorder %s553, 3
        %s555 = scalar_select %p554, %s553, 3
        %s556 = smul.addr %s555, 8
        %s557 = scalar_lea.vmem %s7, %s556
        %s558 = smul.u32 2, %s22
        %s559 = smul.u32 2, %s22
        %p560 = scmp.lt.s32.totalorder %s559, 3
        %s561 = scalar_select %p560, %s559, 3
        %s562 = smul.addr %s561, 8
        %s563 = scalar_lea.vmem %s8, %s562
        %s564 = smul.u32 2, %s22
        %s565 = smul.u32 2, %s22
        %p566 = scmp.lt.s32.totalorder %s565, 3
        %s567 = scalar_select %p566, %s565, 3
        %s568 = smul.addr %s567, 8
        %s569 = scalar_lea.vmem %s9, %s568
        %s570 = smul.u32 2, %s22
        %s571 = smul.u32 2, %s22
        %p572 = scmp.lt.s32.totalorder %s571, 3
        %s573 = scalar_select %p572, %s571, 3
        %s574 = smul.addr %s573, 8
        %s575 = scalar_lea.vmem %s10, %s574
        %s576 = smul.u32 2, %s22
        %v577 = vld [vmem:[%s0] sm:$0xff]
        %v578 = vld [vmem:[%s0 + $0x8] sm:$0xff]
        %v579 = vld [vmem:[%s0 + $0x10] sm:$0xff]
        %v580 = vld [vmem:[%s0 + $0x18] sm:$0xff]
        %v581 = vld [vmem:[%s468] sm:$0xff]
        %v582 = vld [vmem:[%s468 + $0x8] sm:$0xff]
        %v583 = vld [vmem:[%s468 + $0x10] sm:$0xff]
        %v584 = vld [vmem:[%s468 + $0x18] sm:$0xff]
        %v585 = vld [vmem:[%s468 + $0x20] sm:$0xff]
        %v586 = vld [vmem:[%s468 + $0x28] sm:$0xff]
        %v587 = vld [vmem:[%s468 + $0x30] sm:$0xff]
        %v588 = vld [vmem:[%s468 + $0x38] sm:$0xff]
        %v589 = vld [vmem:[%s468 + $0x40] sm:$0xf]
        %v590 = vld [vmem:[%s468 + $0x48] sm:$0xf]
        %v591 = vld [vmem:[%s1] sm:$0xff]
        %v592 = vld [vmem:[%s1 + $0x8] sm:$0xff]
        %v593 = vld [vmem:[%s1 + $0x10] sm:$0xff]
        %v594 = vld [vmem:[%s1 + $0x18] sm:$0xff]
        %v595 = vld [vmem:[%s475] sm:$0xff]
        %v596 = vld [vmem:[%s475 + $0x8] sm:$0xff]
        %v597 = vld [vmem:[%s475 + $0x10] sm:$0xff]
        %v598 = vld [vmem:[%s475 + $0x18] sm:$0xff]
        %v599 = vld [vmem:[%s475 + $0x20] sm:$0xff]
        %v600 = vld [vmem:[%s475 + $0x28] sm:$0xff]
        %v601 = vld [vmem:[%s475 + $0x30] sm:$0xff]
        %v602 = vld [vmem:[%s475 + $0x38] sm:$0xff]
        %v603 = vld [vmem:[%s475 + $0x40] sm:$0xff]
        %v604 = vld [vmem:[%s475 + $0x48] sm:$0xff]
        %v605 = vld [vmem:[%s475 + $0x50] sm:$0xff]
        %v606 = vld [vmem:[%s475 + $0x58] sm:$0xff]
        %v607 = vld [vmem:[%s475 + $0x60] sm:$0xff]
        %v608 = vld [vmem:[%s475 + $0x68] sm:$0xff]
        %v609 = vld [vmem:[%s475 + $0x70] sm:$0xff]
        %v610 = vld [vmem:[%s475 + $0x78] sm:$0xff]
        %v611 = vld [vmem:[%s475 + $0x80] sm:$0xff]
        %v612 = vld [vmem:[%s475 + $0x88] sm:$0xff]
        %vm613 = vcmask 588800
        %v615 = vsel %vm613, %v591, 0
        %v618 = vsel %vm613, %v592, 0
        %v621 = vsel %vm613, %v593, 0
        %v624 = vsel %vm613, %v594, 0
        %626 = vmatprep.subr.mxu0 0.0
        %627 = vmatpush1.msra.mxu0 0.0
        %628 = vmatprep.subr.mxu0 0.0
        %629 = vmatpush1.msra.mxu0 0.0
        %630 = vmatprep.subr.mxu0 0.0
        %631 = vmatpush1.msra.mxu0 0.0
        %632 = vmatprep.subr.mxu0 0.0
        %633 = vmatpush1.msra.mxu0 0.0
        %634 = vmatprep.subr.mxu0 0.0
        %635 = vmatpush1.msra.mxu0 0.0
        %636 = vmatprep.subr.mxu0 0.0
        %637 = vmatpush1.msra.mxu0 0.0
        %638 = vmatprep.subr.mxu0 0.0
        %639 = vmatpush1.msra.mxu0 0.0
        %640 = vmatprep.subr.mxu0 %v612
        %641 = vmatpush1.msra.mxu0 %v611
        %642 = vmatprep.subr.mxu0 %v610
        %643 = vmatpush1.msra.mxu0 %v609
        %644 = vmatprep.subr.mxu0 %v608
        %645 = vmatpush1.msra.mxu0 %v607
        %646 = vmatprep.subr.mxu0 %v606
        %647 = vmatpush1.msra.mxu0 %v605
        %648 = vmatprep.subr.mxu0 %v604
        %649 = vmatpush1.msra.mxu0 %v603
        %650 = vmatprep.subr.mxu0 %v602
        %651 = vmatpush1.msra.mxu0 %v601
        %652 = vmatprep.subr.mxu0 %v600
        %653 = vmatpush1.msra.mxu0 %v599
        %654 = vmatprep.subr.mxu0 %v598
        %655 = vmatpush1.msra.mxu0 %v597
        %656 = vmatprep.subr.mxu0 %v596
        %657 = vmatpush1.msra.mxu0 %v595
        %658 = vmatprep.subr.mxu0 0.0
        %659 = vmatpush2.msra.mxu0 0.0
        %660 = vmatprep.subr.mxu0 0.0
        %661 = vmatpush2.msra.mxu0 0.0
        %662 = vmatprep.subr.mxu0 0.0
        %663 = vmatpush2.msra.mxu0 0.0
        %664 = vmatprep.subr.mxu0 0.0
        %665 = vmatpush2.msra.mxu0 0.0
        %666 = vmatprep.subr.mxu0 0.0
        %667 = vmatpush2.msra.mxu0 0.0
        %668 = vmatprep.subr.mxu0 0.0
        %669 = vmatpush2.msra.mxu0 0.0
        %670 = vmatprep.subr.mxu0 0.0
        %671 = vmatpush2.msra.mxu0 0.0
        %672 = vmatprep.subr.mxu0 0.0
        %673 = vmatpush2.msra.mxu0 0.0
        %674 = vmatprep.subr.mxu0 0.0
        %675 = vmatpush2.msra.mxu0 0.0
        %676 = vmatprep.subr.mxu0 0.0
        %677 = vmatpush2.msra.mxu0 0.0
        %678 = vmatprep.subr.mxu0 0.0
        %679 = vmatpush2.msra.mxu0 0.0
        %680 = vmatprep.subr.mxu0 0.0
        %681 = vmatpush2.msra.mxu0 0.0
        %682 = vmatprep.subr.mxu0 0.0
        %683 = vmatpush2.msra.mxu0 0.0
        %684 = vmatprep.subr.mxu0 0.0
        %685 = vmatpush2.msra.mxu0 0.0
        %686 = vmatprep.subr.mxu0 0.0
        %687 = vmatpush2.msra.mxu0 0.0
        %688 = vmatprep.subr.mxu0 0.0
        %689 = vmatpush2.msra.mxu0 0.0
        %690 = vmatprep.mubr.f32.mxu0 0.0
        %691 = vmatmul.mubr.f32.gmra.mxu0 %v615
        %v692 = vpop.f32.mrf.mxu0
        %v693 = vadd.f32 0.0, %v692
        %v694 = vpop.f32.mrf.mxu0
        %v695 = vadd.f32 0.0, %v694
        %696 = vmatprep.mubr.f32.mxu0 0.0
        %697 = vmatmul.mubr.f32.gmra.mxu0 %v618
        %v698 = vpop.f32.mrf.mxu0
        %v699 = vadd.f32 0.0, %v698
        %v700 = vpop.f32.mrf.mxu0
        %v701 = vadd.f32 0.0, %v700
        %702 = vmatprep.mubr.f32.mxu0 0.0
        %703 = vmatmul.mubr.f32.gmra.mxu0 %v621
        %v704 = vpop.f32.mrf.mxu0
        %v705 = vadd.f32 0.0, %v704
        %v706 = vpop.f32.mrf.mxu0
        %v707 = vadd.f32 0.0, %v706
        %708 = vmatprep.mubr.f32.mxu0 0.0
        %709 = vmatmul.mubr.f32.gmra.mxu0 %v624
        %v710 = vpop.f32.mrf.mxu0
        %v711 = vadd.f32 0.0, %v710
        %v712 = vpop.f32.mrf.mxu0
        %v713 = vadd.f32 0.0, %v712
        %714 = vdwg.mxu0
        %vm715 = vcmask 293888
        %v717 = vsel %vm715, %v577, 0
        %v720 = vsel %vm715, %v578, 0
        %v723 = vsel %vm715, %v579, 0
        %v726 = vsel %vm715, %v580, 0
        %vm728 = vcmask 1043456
        %v730 = vsel %vm728, %v589, 0
        %v733 = vsel %vm728, %v590, 0
        %735 = vmatprep.subr.mxu0 0.0
        %736 = vmatpush1.msra.mxu0 0.0
        %737 = vmatprep.subr.mxu0 0.0
        %738 = vmatpush1.msra.mxu0 0.0
        %739 = vmatprep.subr.mxu0 0.0
        %740 = vmatpush1.msra.mxu0 0.0
        %741 = vmatprep.subr.mxu0 0.0
        %742 = vmatpush1.msra.mxu0 0.0
        %743 = vmatprep.subr.mxu0 0.0
        %744 = vmatpush1.msra.mxu0 0.0
        %745 = vmatprep.subr.mxu0 0.0
        %746 = vmatpush1.msra.mxu0 0.0
        %747 = vmatprep.subr.mxu0 0.0
        %748 = vmatpush1.msra.mxu0 0.0
        %749 = vmatprep.subr.mxu0 0.0
        %750 = vmatpush1.msra.mxu0 0.0
        %751 = vmatprep.subr.mxu0 0.0
        %752 = vmatpush1.msra.mxu0 0.0
        %753 = vmatprep.subr.mxu0 0.0
        %754 = vmatpush1.msra.mxu0 0.0
        %755 = vmatprep.subr.mxu0 0.0
        %756 = vmatpush1.msra.mxu0 0.0
        %757 = vmatprep.subr.mxu0 %v733
        %758 = vmatpush1.msra.mxu0 %v730
        %759 = vmatprep.subr.mxu0 %v588
        %760 = vmatpush1.msra.mxu0 %v587
        %761 = vmatprep.subr.mxu0 %v586
        %762 = vmatpush1.msra.mxu0 %v585
        %763 = vmatprep.subr.mxu0 %v584
        %764 = vmatpush1.msra.mxu0 %v583
        %765 = vmatprep.subr.mxu0 %v582
        %766 = vmatpush1.msra.mxu0 %v581
        %767 = vmatprep.subr.mxu0 0.0
        %768 = vmatpush2.msra.mxu0 0.0
        %769 = vmatprep.subr.mxu0 0.0
        %770 = vmatpush2.msra.mxu0 0.0
        %771 = vmatprep.subr.mxu0 0.0
        %772 = vmatpush2.msra.mxu0 0.0
        %773 = vmatprep.subr.mxu0 0.0
        %774 = vmatpush2.msra.mxu0 0.0
        %775 = vmatprep.subr.mxu0 0.0
        %776 = vmatpush2.msra.mxu0 0.0
        %777 = vmatprep.subr.mxu0 0.0
        %778 = vmatpush2.msra.mxu0 0.0
        %779 = vmatprep.subr.mxu0 0.0
        %780 = vmatpush2.msra.mxu0 0.0
        %781 = vmatprep.subr.mxu0 0.0
        %782 = vmatpush2.msra.mxu0 0.0
        %783 = vmatprep.subr.mxu0 0.0
        %784 = vmatpush2.msra.mxu0 0.0
        %785 = vmatprep.subr.mxu0 0.0
        %786 = vmatpush2.msra.mxu0 0.0
        %787 = vmatprep.subr.mxu0 0.0
        %788 = vmatpush2.msra.mxu0 0.0
        %789 = vmatprep.subr.mxu0 0.0
        %790 = vmatpush2.msra.mxu0 0.0
        %791 = vmatprep.subr.mxu0 0.0
        %792 = vmatpush2.msra.mxu0 0.0
        %793 = vmatprep.subr.mxu0 0.0
        %794 = vmatpush2.msra.mxu0 0.0
        %795 = vmatprep.subr.mxu0 0.0
        %796 = vmatpush2.msra.mxu0 0.0
        %797 = vmatprep.subr.mxu0 0.0
        %798 = vmatpush2.msra.mxu0 0.0
        %799 = vmatprep.mubr.f32.mxu0 0.0
        %800 = vmatmul.mubr.f32.gmra.mxu0 %v717
        %v801 = vpop.f32.mrf.mxu0
        %v802 = vadd.f32 %v693, %v801
        %v803 = vpop.f32.mrf.mxu0
        %v804 = vadd.f32 %v695, %v803
        %805 = vmatprep.mubr.f32.mxu0 0.0
        %806 = vmatmul.mubr.f32.gmra.mxu0 %v720
        %v807 = vpop.f32.mrf.mxu0
        %v808 = vadd.f32 %v699, %v807
        %v809 = vpop.f32.mrf.mxu0
        %v810 = vadd.f32 %v701, %v809
        %811 = vmatprep.mubr.f32.mxu0 0.0
        %812 = vmatmul.mubr.f32.gmra.mxu0 %v723
        %v813 = vpop.f32.mrf.mxu0
        %v814 = vadd.f32 %v705, %v813
        %v815 = vpop.f32.mrf.mxu0
        %v816 = vadd.f32 %v707, %v815
        %817 = vmatprep.mubr.f32.mxu0 0.0
        %818 = vmatmul.mubr.f32.gmra.mxu0 %v726
        %v819 = vpop.f32.mrf.mxu0
        %v820 = vadd.f32 %v711, %v819
        %v821 = vpop.f32.mrf.mxu0
        %v822 = vadd.f32 %v713, %v821
        %823 = vdwg.mxu0
        %v824 = vld [vmem:[%s2] sm:$0xff]
        %v825 = vld [vmem:[%s2 + $0x8] sm:$0xff]
        %v826 = vld [vmem:[%s2 + $0x10] sm:$0xff]
        %v827 = vld [vmem:[%s2 + $0x18] sm:$0xff]
        %829 = vset.pattern.permute.xlu0 0
        %830 = vperm.xlu0 %829, %v824
        %v831 = vpop.permute.xlu0 %830
        %834 = vset.pattern.permute.xlu0 0
        %835 = vperm.xlu0 %834, %v825
        %v836 = vpop.permute.xlu0 %835
        %839 = vset.pattern.permute.xlu0 0
        %840 = vperm.xlu0 %839, %v826
        %v841 = vpop.permute.xlu0 %840
        %844 = vset.pattern.permute.xlu0 0
        %845 = vperm.xlu0 %844, %v827
        %v846 = vpop.permute.xlu0 %845
        %v848 = vadd.f32 %v802, %v831
        %v849 = vadd.f32 %v804, %v831
        %v850 = vadd.f32 %v808, %v836
        %v851 = vadd.f32 %v810, %v836
        %v852 = vadd.f32 %v814, %v841
        %v853 = vadd.f32 %v816, %v841
        %v854 = vadd.f32 %v820, %v846
        %v855 = vadd.f32 %v822, %v846
        %v856 = vld [vmem:[%s545] sm:$0xff]
        %v857 = vld [vmem:[%s545 + $0x8] sm:$0xff]
        %v858 = vld [vmem:[%s551] sm:$0xff]
        %v859 = vld [vmem:[%s551 + $0x8] sm:$0xff]
        %v860 = vmul.f32 %v856, %v858
        %v861 = vmul.f32 %v857, %v859
        %v862 = vadd.f32 %v848, %v860
        %v863 = vadd.f32 %v849, %v861
        %v864 = vxor.u32 %v862, 2147483648
        %v865 = vxor.u32 %v863, 2147483648
        %v866 = vmul.f32 %v864, 1.442695
        %v867 = vpow.pop %v866
        %v868 = vmul.f32 %v865, 1.442695
        %v869 = vpow.pop %v868
        %v870 = vadd.f32 %v867, 1.0
        %v871 = vadd.f32 %v869, 1.0
        %v872 = vrcp.pop %v870
        %v873 = vmul.f32 1.0, %v872
        %v874 = vrcp.pop %v871
        %v875 = vmul.f32 1.0, %v874
        %v876 = vld [vmem:[%s557] sm:$0xff]
        %v877 = vld [vmem:[%s557 + $0x8] sm:$0xff]
        %v878 = vmul.f32 %v856, %v876
        %v879 = vmul.f32 %v857, %v877
        %v880 = vadd.f32 %v850, %v878
        %v881 = vadd.f32 %v851, %v879
        %v882 = vxor.u32 %v880, 2147483648
        %v883 = vxor.u32 %v881, 2147483648
        %v884 = vmul.f32 %v882, 1.442695
        %v885 = vpow.pop %v884
        %v886 = vmul.f32 %v883, 1.442695
        %v887 = vpow.pop %v886
        %v888 = vadd.f32 %v885, 1.0
        %v889 = vadd.f32 %v887, 1.0
        %v890 = vrcp.pop %v888
        %v891 = vmul.f32 1.0, %v890
        %v892 = vrcp.pop %v889
        %v893 = vmul.f32 1.0, %v892
        %v894 = vmul.f32 %v891, %v856
        %v895 = vmul.f32 %v893, %v857
        %v896 = vtanh.pop %v852
        %v897 = vtanh.pop %v853
        %v898 = vmul.f32 %v873, %v896
        %v899 = vmul.f32 %v875, %v897
        %v900 = vadd.f32 %v894, %v898
        %v901 = vadd.f32 %v895, %v899
        %v902 = vld [vmem:[%s563] sm:$0xff]
        %v903 = vld [vmem:[%s563 + $0x8] sm:$0xff]
        %v904 = vmul.f32 %v900, %v902
        %v905 = vmul.f32 %v901, %v903
        %v906 = vadd.f32 %v854, %v904
        %v907 = vadd.f32 %v855, %v905
        %v908 = vxor.u32 %v906, 2147483648
        %v909 = vxor.u32 %v907, 2147483648
        %v910 = vmul.f32 %v908, 1.442695
        %v911 = vpow.pop %v910
        %v912 = vmul.f32 %v909, 1.442695
        %v913 = vpow.pop %v912
        %v914 = vadd.f32 %v911, 1.0
        %v915 = vadd.f32 %v913, 1.0
        %v916 = vrcp.pop %v914
        %v917 = vmul.f32 1.0, %v916
        %v918 = vrcp.pop %v915
        %v919 = vmul.f32 1.0, %v918
        %v920 = vtanh.pop %v900
        %v921 = vtanh.pop %v901
        %v922 = vmul.f32 %v917, %v920
        %v923 = vmul.f32 %v919, %v921
        %924 = vst [vmem:[%s569] sm:$0xff] %v922
        %925 = vst [vmem:[%s569 + $0x8] sm:$0xff] %v923
        %926 = vst [vmem:[%s575] sm:$0xff] %v900
        %927 = vst [vmem:[%s575 + $0x8] sm:$0xff] %v901
        %s928 = smul.u32 2, %s22
        %p929 = scmp.lt.s32.totalorder %s928, 3
        %s930 = scalar_select %p929, %s928, 3
        %s931 = smul.addr %s930, 8
        %s932 = scalar_lea.vmem %s9, %s931
        %s933 = smul.u32 2, %s22
        %p934 = scmp.lt.s32.totalorder %s933, 3
        %s935 = scalar_select %p934, %s933, 3
        %s936 = smul.addr %s935, 8
        %s937 = scalar_lea.vmem %s10, %s936
        // Predicated region
        $region103: #{convlstm_cell_forward.1} parent=93 // pred_check
          %p938 = pneg %p259
        $region104: #{convlstm_cell_forward.1} parent=93 // pred_check_branch
          %940 = sbr.rel (%p938) target = $region106
        $region105: #{convlstm_cell_forward.1} parent=93 // pred_region
          %s941 = smul.u32 2, %s22
        $region106: #{convlstm_cell_forward.1} parent=93 // pred_fallthru
          _
        // Predicated region
        $region107: #{convlstm_cell_forward.1} parent=93 // pred_check
          %p942 = pneg %p285
        $region108: #{convlstm_cell_forward.1} parent=93 // pred_check_branch
          %944 = sbr.rel (%p942) target = $region110
        $region109: #{convlstm_cell_forward.1} parent=93 // pred_region
          %s945 = smul.u32 2, %s22
        $region110: #{convlstm_cell_forward.1} parent=93 // pred_fallthru
          _
      $region94: #{convlstm_cell_forward.1} parent=5 // pred_fallthru
        _
      %p946 = scmp.le.s32.totalorder 2, %s17
      // Predicated region
      $region111: #{convlstm_cell_forward.1} parent=5 // pred_check
        %p947 = pneg %p946
      $region112: #{convlstm_cell_forward.1} parent=5 // pred_check_branch
        %949 = sbr.rel (%p947) target = $region114
      $region113: #{convlstm_cell_forward.1} parent=5 // pred_region
        %s950 = ssub.s32 %s17, 2
        // Predicated region
        $region115: #{convlstm_cell_forward.1} parent=113 // pred_check
          %p951 = pneg %p265
        $region116: #{convlstm_cell_forward.1} parent=113 // pred_check_branch
          %953 = sbr.rel (%p951) target = $region118
        $region117: #{convlstm_cell_forward.1} parent=113 // pred_region
          %s954 = smul.u32 2, %s23
          %p955 = scmp.lt.s32.totalorder %s954, 3
          %s956 = scalar_select %p955, %s954, 3
          %s957 = smul.addr %s956, 8
          %s958 = scalar_lea.vmem %s9, %s957
        $region118: #{convlstm_cell_forward.1} parent=113 // pred_fallthru
          _
        // Predicated region
        $region119: #{convlstm_cell_forward.1} parent=113 // pred_check
          %p959 = pneg %p291
        $region120: #{convlstm_cell_forward.1} parent=113 // pred_check_branch
          %961 = sbr.rel (%p959) target = $region122
        $region121: #{convlstm_cell_forward.1} parent=113 // pred_region
          %s962 = smul.u32 2, %s23
          %p963 = scmp.lt.s32.totalorder %s962, 3
          %s964 = scalar_select %p963, %s962, 3
          %s965 = smul.addr %s964, 8
          %s966 = scalar_lea.vmem %s10, %s965
        $region122: #{convlstm_cell_forward.1} parent=113 // pred_fallthru
          _
      $region114: #{convlstm_cell_forward.1} parent=5 // pred_fallthru
        _
    $region6: #{convlstm_cell_forward.1} parent=1 // loop_footer
      %s21 = sadd.s32 1, %s17
    $region7: #{convlstm_cell_forward.1} parent=1 // loop_footer_branch
      %16 = sbr.rel target = $region3
    $region8: #{convlstm_cell_forward.1} parent=1 // loop_exit
      _

</llo_original>
